<compile_context>
chip_gen: v7x
topology: tpu7x:2x2x1
jax: 0.10.0
libtpu: 0.0.40
codegen_flags: <defaults>
</compile_context>

<pallas_src>
import functools

import jax
import jax.numpy as jnp
from jax.experimental import pallas as pl
from jax.experimental.pallas import tpu as pltpu


def _nll_loss_kernel(pred_ref, tgt_ref, out_ref, acc_ref, *, n_total, inv_n):
    i = pl.program_id(0)

    @pl.when(i == 0)
    def _init():
        acc_ref[...] = jnp.zeros_like(acc_ref)

    pred = pred_ref[...]          # (TN, C) f32 log-probs
    tgt = tgt_ref[...]            # (TN, 1) i32 class indices
    tn, c = pred.shape

    # One-hot select pred[i, target[i]] via iota-compare on the lane axis,
    # combined with a validity mask on the global row index (handles the
    # ragged final tile; padded rows contribute 0 to the sum).
    class_ids = jax.lax.broadcasted_iota(jnp.int32, (tn, c), 1)
    row_ids = jax.lax.broadcasted_iota(jnp.int32, (tn, c), 0) + i * tn
    mask = (class_ids == tgt) & (row_ids < n_total)

    picked = jnp.where(mask, pred, 0.0)
    partial = jnp.sum(jnp.sum(picked, axis=1, keepdims=True),
                      axis=0, keepdims=True)        # (1, 1) partial sum
    acc_ref[...] += partial

    @pl.when(i == pl.num_programs(0) - 1)
    def _finalize():
        # scale by 1 / total_N only once, at the end (pure accumulation inside)
        out_ref[...] = -acc_ref[...] * jnp.float32(inv_n)


def nll_loss(pred, target, *, tile_rows=None):
    """pred: (N, C) float log-probs; target: (N,) int. Returns scalar f32."""
    n, c = pred.shape
    pred = pred.astype(jnp.float32)
    # int64 -> int32 cast is safe while C < 2**31 (always true in practice).
    tgt2d = target.astype(jnp.int32).reshape(n, 1)

    if tile_rows is None:
        # ~4 MiB per pred buffer; Pallas double-buffers => ~8 MiB VMEM, which
        # fits scoped-VMEM defaults on v5e / v6e / v7x alike.
        lane_bytes = max(c, 128) * 4          # C < 128 pads to a 128-lane row
        tile_rows = (4 * 1024 * 1024) // lane_bytes
        tile_rows = max(8, min(1024, tile_rows))
    tile_rows = min(tile_rows, n)
    if n >= 8:
        tile_rows = max(8, (tile_rows // 8) * 8)   # sublane-aligned tiles
    num_tiles = pl.cdiv(n, tile_rows)

    kernel = functools.partial(_nll_loss_kernel, n_total=n, inv_n=1.0 / n)

    out = pl.pallas_call(
        kernel,
        out_shape=jax.ShapeDtypeStruct((1, 1), jnp.float32),
        grid=(num_tiles,),
        in_specs=[
            pl.BlockSpec((tile_rows, c), lambda i: (i, 0)),
            pl.BlockSpec((tile_rows, 1), lambda i: (i, 0)),
        ],
        out_specs=pl.BlockSpec((1, 1), lambda i: (0, 0)),
        scratch_shapes=[pltpu.VMEM((1, 1), jnp.float32)],
        compiler_params=pltpu.CompilerParams(
            # single grid axis is a reduction into one scalar -> arbitrary
            dimension_semantics=("arbitrary",),
            vmem_limit_bytes=32 * 1024 * 1024,
        ),
        cost_estimate=pl.CostEstimate(
            flops=2 * n * c,
            transcendentals=0,
            bytes_accessed=4 * n * c + 4 * n + 4,
        ),
    )(pred, tgt2d)
    return out[0, 0]


if __name__ == "__main__":
    key = jax.random.PRNGKey(0)
    k_logits, k_tgt = jax.random.split(key)

    # Small shapes consistent with the module's forward: (N, C) log-probs.
    N, C = 32, 16
    logits = jax.random.normal(k_logits, (N, C), dtype=jnp.float32)
    pred = jax.nn.log_softmax(logits, axis=-1)      # log-probs, as F.nll_loss expects
    target = jax.random.randint(k_tgt, (N,), 0, C, dtype=jnp.int32)

    loss = nll_loss(pred, target)
    loss = jax.block_until_ready(loss)

    ref = -jnp.mean(pred[jnp.arange(N), target])
    assert jnp.allclose(loss, ref, atol=1e-5, rtol=1e-5), (loss, ref)

    # Exercise the multi-tile accumulation path + ragged final tile.
    N2 = 20
    logits2 = jax.random.normal(jax.random.PRNGKey(1), (N2, C), dtype=jnp.float32)
    pred2 = jax.nn.log_softmax(logits2, axis=-1)
    target2 = jax.random.randint(jax.random.PRNGKey(2), (N2,), 0, C, dtype=jnp.int32)

    loss2 = jax.block_until_ready(nll_loss(pred2, target2, tile_rows=8))
    ref2 = -jnp.mean(pred2[jnp.arange(N2), target2])
    assert jnp.allclose(loss2, ref2, atol=1e-5, rtol=1e-5), (loss2, ref2)

    print("KERNEL_OK")
</pallas_src>

<mosaic_0001>
module attributes {stable_mosaic.version = 11 : i64} {
  func.func @_nll_loss_kernel(%arg0: i32, %arg1: memref<32x16xf32, #tpu.memory_space<vmem>>, %arg2: memref<32x1xi32, #tpu.memory_space<vmem>>, %arg3: memref<1x1xf32, #tpu.memory_space<vmem>>, %arg4: memref<1x1xf32, #tpu.memory_space<vmem>>) attributes {dimension_semantics = [#tpu.dimension_semantics<arbitrary>], iteration_bounds = array<i64: 1>, scalar_prefetch = 0 : i64, scratch_operands = 1 : i64, tpu.core_type = #tpu.core_type<tc>, window_params = [{transform_indices = @transform_0, window_bounds = array<i64: 32, 16>}, {transform_indices = @transform_1, window_bounds = array<i64: 32, 1>}, {pipeline_mode = #tpu.pipeline_mode<synchronous>, transform_indices = @transform_2, window_bounds = array<i64: 1, 1>}]} {
    %c0_i32 = arith.constant 0 : i32
    %0 = arith.cmpi eq, %arg0, %c0_i32 : i32
    %1 = arith.extui %0 : i1 to i32
    %c0_i32_0 = arith.constant 0 : i32
    %2 = arith.cmpi ne, %1, %c0_i32_0 : i32
    scf.if %2 {
      %cst_13 = arith.constant 0.000000e+00 : f32
      %27 = vector.broadcast %cst_13 : f32 to vector<1x1xf32>
      %c0_14 = arith.constant 0 : index
      %c0_15 = arith.constant 0 : index
      %28 = vector.load %arg4[%c0_14, %c0_15] : memref<1x1xf32, #tpu.memory_space<vmem>>, vector<1x1xf32>
      tpu.vector_store %arg4[%c0_14, %c0_15], %27 {strides = array<i32>} : memref<1x1xf32, #tpu.memory_space<vmem>>, vector<1x1xf32>,
    } else {
    }
    %c0 = arith.constant 0 : index
    %c0_1 = arith.constant 0 : index
    %3 = vector.load %arg1[%c0, %c0_1] : memref<32x16xf32, #tpu.memory_space<vmem>>, vector<32x16xf32>
    %c0_2 = arith.constant 0 : index
    %c0_3 = arith.constant 0 : index
    %4 = vector.load %arg2[%c0_2, %c0_3] : memref<32x1xi32, #tpu.memory_space<vmem>>, vector<32x1xi32>
    %5 = tpu.iota {dimensions = array<i32: 1>} : vector<32x16xi32>
    %6 = tpu.iota {dimensions = array<i32: 0>} : vector<32x16xi32>
    %c32_i32 = arith.constant 32 : i32
    %7 = arith.muli %arg0, %c32_i32 : i32
    %8 = vector.broadcast %7 : i32 to vector<32x16xi32>
    %9 = arith.addi %6, %8 : vector<32x16xi32>
    %10 = vector.broadcast %4 : vector<32x1xi32> to vector<32x16xi32>
    %11 = arith.cmpi eq, %5, %10 : vector<32x16xi32>
    %c32_i32_4 = arith.constant 32 : i32
    %12 = vector.broadcast %c32_i32_4 : i32 to vector<32x16xi32>
    %13 = arith.cmpi slt, %9, %12 : vector<32x16xi32>
    %14 = arith.andi %11, %13 : vector<32x16xi1>
    %cst = arith.constant 0.000000e+00 : f32
    %15 = vector.broadcast %cst : f32 to vector<32x16xf32>
    %16 = arith.select %14, %3, %15 : vector<32x16xi1>, vector<32x16xf32>
    %cst_5 = arith.constant dense<0.000000e+00> : vector<32xf32>
    %17 = vector.multi_reduction <add>, %16, %cst_5 [1] : vector<32x16xf32> to vector<32xf32>
    %18 = vector.shape_cast %17 : vector<32xf32> to vector<32x1xf32>
    %cst_6 = arith.constant dense<0.000000e+00> : vector<1xf32>
    %19 = vector.multi_reduction <add>, %18, %cst_6 [0] : vector<32x1xf32> to vector<1xf32>
    %20 = vector.shape_cast %19 : vector<1xf32> to vector<1x1xf32>
    %c0_7 = arith.constant 0 : index
    %c0_8 = arith.constant 0 : index
    %21 = vector.load %arg4[%c0_7, %c0_8] : memref<1x1xf32, #tpu.memory_space<vmem>>, vector<1x1xf32>
    %22 = arith.addf %21, %20 : vector<1x1xf32>
    %c0_9 = arith.constant 0 : index
    %c0_10 = arith.constant 0 : index
    %23 = vector.load %arg4[%c0_9, %c0_10] : memref<1x1xf32, #tpu.memory_space<vmem>>, vector<1x1xf32>
    tpu.vector_store %arg4[%c0_9, %c0_10], %22 {strides = array<i32>} : memref<1x1xf32, #tpu.memory_space<vmem>>, vector<1x1xf32>,
    %c0_i32_11 = arith.constant 0 : i32
    %24 = arith.cmpi eq, %arg0, %c0_i32_11 : i32
    %25 = arith.extui %24 : i1 to i32
    %c0_i32_12 = arith.constant 0 : i32
    %26 = arith.cmpi ne, %25, %c0_i32_12 : i32
    scf.if %26 {
      %c0_13 = arith.constant 0 : index
      %c0_14 = arith.constant 0 : index
      %27 = vector.load %arg4[%c0_13, %c0_14] : memref<1x1xf32, #tpu.memory_space<vmem>>, vector<1x1xf32>
      %cst_15 = arith.constant 0.000000e+00 : f32
      %28 = vector.broadcast %cst_15 : f32 to vector<1x1xf32>
      %29 = arith.subf %28, %27 : vector<1x1xf32>
      %cst_16 = arith.constant 3.125000e-02 : f32
      %30 = vector.broadcast %cst_16 : f32 to vector<1x1xf32>
      %31 = arith.mulf %29, %30 : vector<1x1xf32>
      %c0_17 = arith.constant 0 : index
      %c0_18 = arith.constant 0 : index
      %32 = vector.load %arg3[%c0_17, %c0_18] : memref<1x1xf32, #tpu.memory_space<vmem>>, vector<1x1xf32>
      tpu.vector_store %arg3[%c0_17, %c0_18], %31 {strides = array<i32>} : memref<1x1xf32, #tpu.memory_space<vmem>>, vector<1x1xf32>,
    } else {
    }
    return
  }
  func.func @transform_0(%arg0: i32) -> (i32, i32) {
    %c0_i32 = arith.constant 0 : i32
    %c0_i32_0 = arith.constant 0 : i32
    return %arg0, %c0_i32 : i32, i32
  }
  func.func @transform_1(%arg0: i32) -> (i32, i32) {
    %c0_i32 = arith.constant 0 : i32
    %c0_i32_0 = arith.constant 0 : i32
    return %arg0, %c0_i32 : i32, i32
  }
  func.func @transform_2(%arg0: i32) -> (i32, i32) {
    %c0_i32 = arith.constant 0 : i32
    %c0_i32_0 = arith.constant 0 : i32
    %c0_i32_1 = arith.constant 0 : i32
    return %c0_i32, %c0_i32_0 : i32, i32
  }
}

</mosaic_0001>

<llo_original>
// kernel: tpu_custom_call.1
$region0: #{tpu_custom_call.1}
  #allocation0 [shape = 'u32[]', space=smem, size = 0x4, offset = 0x4, fixed_abs, tag = 'smem constant byte address 0x4 - core index']
  #allocation1 [shape = 'u32[144,128]{1,0:T(1,128)}', space=vmem, size = 0x12000, scoped, tag = 'internal scratch']
  #allocation2 [shape = 'f32[1,1]{1,0:T(1,128)}', space=vmem, size = 0x200, scoped, tag = 'scratch operand']
  %s0 = inlined_call_operand.vmem [shape: f32[32,16], index: 0, kind: input, shape index: {}]
  %s1 = inlined_call_operand.vmem [shape: s32[32,1], index: 1, kind: input, shape index: {}]
  %s2 = inlined_call_operand.hbm [shape: f32[1,1], index: 2, kind: output, shape index: {}]
  %s3 = sld [smem:[#allocation0]]
  $region26: #{tpu_custom_call.1} parent=0
    _
  %s5 = ssub.s32 1, %s3
  %s6 = scalar_select 0, %s5, %s3
  $region1: #{tpu_custom_call.1} parent=0
    #allocation3 [shape = 'u8[512]{0}', space=vmem, size = 0x400, scoped, tag = 'output window, operand 0, single buffered']
    #allocation4 [shape = 's32[1]{0}', space=sflag, size = 0x4, scoped, tag = 'scoped memory for tpu_custom_call.1']
    %7 = vsyncpa [#allocation4], 0
    // Predicated region
    $region2: #{tpu_custom_call.1} parent=1 // pred_check
      _
    $region3: #{tpu_custom_call.1} parent=1 // pred_check_branch
      %9 = sbr.rel (0) target = $region5
    $region4: #{tpu_custom_call.1} parent=1 // pred_region
      _
    $region5: #{tpu_custom_call.1} parent=1 // pred_fallthru
      _
    // Predicated region
    $region6: #{tpu_custom_call.1} parent=1 // pred_check
      _
    $region7: #{tpu_custom_call.1} parent=1 // pred_check_branch
      %11 = sbr.rel (0) target = $region9
    $region8: #{tpu_custom_call.1} parent=1 // pred_region
      _
    $region9: #{tpu_custom_call.1} parent=1 // pred_fallthru
      _
    %p12 = scmp.eq.s32.totalorder 0, 0
    // Predicated region
    $region10: #{tpu_custom_call.1} parent=1 // pred_check
      %p13 = pneg %p12
    $region11: #{tpu_custom_call.1} parent=1 // pred_check_branch
      %15 = sbr.rel (%p13) target = $region13
    $region12: #{tpu_custom_call.1} parent=1 // pred_region
      %vm16 = vcmask 0
      %17 = vst.msk [vmem:[#allocation2] sm:$0x1] %vm16, 0.0
    $region13: #{tpu_custom_call.1} parent=1 // pred_fallthru
      _
    %v18 = vld [vmem:[%s0] sm:$0xff]
    %v19 = vld [vmem:[%s0 + $0x8] sm:$0xff]
    %v20 = vld [vmem:[%s0 + $0x10] sm:$0xff]
    %v21 = vld [vmem:[%s0 + $0x18] sm:$0xff]
    %v22 = vld [vmem:[%s1] sm:$0xff]
    %v23 = vld [vmem:[%s1 + $0x8] sm:$0xff]
    %v24 = vld [vmem:[%s1 + $0x10] sm:$0xff]
    %v25 = vld [vmem:[%s1 + $0x18] sm:$0xff]
    %v26 = vlaneseq
    %v27 = vand.u32 %v26, 127
    %v28 = vlaneseq
    %v29 = vshrl.u32 %v28, 7
    %v30 = vadd.s32 %v29, 8
    %v31 = vadd.s32 %v29, 16
    %v32 = vadd.s32 %v29, 24
    %s33 = smul.u32 0, 32
    %v34 = vstv %s33
    %v35 = vadd.s32 %v29, %v34
    %v36 = vadd.s32 %v30, %v34
    %v37 = vadd.s32 %v31, %v34
    %v38 = vadd.s32 %v32, %v34
    %39 = vset.pattern.permute.xlu0 0
    %40 = vperm.xlu0 %39, %v22
    %v41 = vpop.permute.xlu0 %40
    %42 = vset.pattern.permute.xlu0 0
    %43 = vperm.xlu0 %42, %v23
    %v44 = vpop.permute.xlu0 %43
    %45 = vset.pattern.permute.xlu0 0
    %46 = vperm.xlu0 %45, %v24
    %v47 = vpop.permute.xlu0 %46
    %48 = vset.pattern.permute.xlu0 0
    %49 = vperm.xlu0 %48, %v25
    %v50 = vpop.permute.xlu0 %49
    %vm51 = vcmp.eq.s32.totalorder %v27, %v41
    %vm52 = vcmp.eq.s32.totalorder %v27, %v44
    %vm53 = vcmp.eq.s32.totalorder %v27, %v47
    %vm54 = vcmp.eq.s32.totalorder %v27, %v50
    %vm55 = vcmp.lt.s32.totalorder %v35, 32
    %vm56 = vcmp.lt.s32.totalorder %v36, 32
    %vm57 = vcmp.lt.s32.totalorder %v37, 32
    %vm58 = vcmp.lt.s32.totalorder %v38, 32
    %vm59 = vmand %vm51, %vm55
    %vm60 = vmand %vm52, %vm56
    %vm61 = vmand %vm53, %vm57
    %vm62 = vmand %vm54, %vm58
    %v63 = vsel %vm59, %v18, 0.0
    %v64 = vsel %vm60, %v19, 0.0
    %v65 = vsel %vm61, %v20, 0.0
    %v66 = vsel %vm62, %v21, 0.0
    %vm67 = vcmask 130048
    %v68 = vsel %vm67, %v63, 0.0
    %69 = vadd.xlane.f32.xlu0 %v68
    %v70 = vpop.xlane.xlu0 %69
    %v71 = vsel %vm67, %v64, 0.0
    %72 = vadd.xlane.f32.xlu0 %v71
    %v73 = vpop.xlane.xlu0 %72
    %v74 = vsel %vm67, %v65, 0.0
    %75 = vadd.xlane.f32.xlu0 %v74
    %v76 = vpop.xlane.xlu0 %75
    %v77 = vsel %vm67, %v66, 0.0
    %78 = vadd.xlane.f32.xlu0 %v77
    %v79 = vpop.xlane.xlu0 %78
    %v80 = vadd.f32 %v70, %v73
    %v81 = vadd.f32 %v80, %v76
    %v82 = vadd.f32 %v81, %v79
    %v83 = vrot.slane %v82, 4
    %v84 = vadd.f32 %v82, %v83
    %v85 = vrot.slane %v84, 2
    %v86 = vadd.f32 %v84, %v85
    %v87 = vrot.slane %v86, 1
    %v88 = vadd.f32 %v86, %v87
    %v89 = vld [vmem:[#allocation2] sm:$0x1]
    %v90 = vadd.f32 %v89, %v88
    %vm91 = vcmask 0
    %92 = vst.msk [vmem:[#allocation2] sm:$0x1] %vm91, %v90
    // Predicated region
    $region14: #{tpu_custom_call.1} parent=1 // pred_check
      %p93 = pneg %p12
    $region15: #{tpu_custom_call.1} parent=1 // pred_check_branch
      %95 = sbr.rel (%p93) target = $region17
    $region16: #{tpu_custom_call.1} parent=1 // pred_region
      %v96 = vld [vmem:[#allocation2] sm:$0x1]
      %v97 = vsub.f32 0.0, %v96
      %v98 = vmul.f32 %v97, 0.03125
      %99 = vst.msk [vmem:[#allocation3] sm:$0x1] %vm91, %v98
    $region17: #{tpu_custom_call.1} parent=1 // pred_fallthru
      _
    // Predicated region
    $region18: #{tpu_custom_call.1} parent=1 // pred_check
      _
    $region19: #{tpu_custom_call.1} parent=1 // pred_check_branch
      %101 = sbr.rel (0) target = $region21
    $region20: #{tpu_custom_call.1} parent=1 // pred_region
      %s103 = ssub.s32 16, 16
      %104 = vsyncadd [#allocation4], %s103
      %s106 = sshll.u32 [#allocation3], 4
      %s107 = int_to_ptr.vmem [resolvable:$true] %s106
      %109 = dma.vmem_to_hbm [thread:$0]  %s107, 16, %s2, [#allocation4]
    $region21: #{tpu_custom_call.1} parent=1 // pred_fallthru
      _
    // Predicated region
    $region22: #{tpu_custom_call.1} parent=1 // pred_check
      _
    $region23: #{tpu_custom_call.1} parent=1 // pred_check_branch
      %111 = sbr.rel (0) target = $region25
    $region24: #{tpu_custom_call.1} parent=1 // pred_region
      %112 = dma.done [#allocation4], 16
    $region25: #{tpu_custom_call.1} parent=1 // pred_fallthru
      _
    %113 = vsyncpa [#allocation4], 1

</llo_original>
